<compile_context>
chip_gen: v7x
topology: tpu7x:2x2x1
jax: 0.10.0
libtpu: 0.0.40
codegen_flags: <defaults>
</compile_context>

<pallas_src>
import functools
import numpy as np
import jax
import jax.numpy as jnp
from jax.experimental import pallas as pl
from jax.experimental.pallas import tpu as pltpu

BN_EPS = 1e-5


def _round_up(x, m):
    return (x + m - 1) // m * m


def _choose_tm(M):
    """Tile along M; picked so real activations never need M padding."""
    if M >= 128 and M % 128 == 0:
        return 128, M
    Mp = _round_up(M, 8)
    return Mp, Mp


def _choose_tn(N):
    """Tile along N; keep >=2 j-blocks when possible (v7x), 256-wide otherwise."""
    if N % 256 == 0 and N >= 512:
        return 256, N
    if N % 128 == 0:
        return 128, N
    if N < 128:
        return N, N          # full-dim block (e.g. N=64 early layers)
    Np = _round_up(N, 128)   # fc layer: N=258 -> 384
    return 128, Np


# ----------------------------------------------------------------------------
# Pallas kernel: full-K matmul with fused BN scale/bias (+ residual) (+ ReLU)
# ----------------------------------------------------------------------------
def _matmul_fused_kernel(relu, has_res, *refs):
    if has_res:
        a_ref, b_ref, s_ref, c_ref, r_ref, o_ref = refs
    else:
        a_ref, b_ref, s_ref, c_ref, o_ref = refs
        r_ref = None
    acc = jnp.dot(a_ref[...], b_ref[...], preferred_element_type=jnp.float32)
    y = acc * s_ref[...] + c_ref[...]
    if has_res:
        y = y + r_ref[...].astype(jnp.float32)
    if relu:
        y = jnp.maximum(y, 0.0)
    o_ref[...] = y.astype(o_ref.dtype)


def matmul_fused(a, pack, relu, residual=None, out_dtype=jnp.bfloat16):
    """y = relu_opt((a @ B) * scale + bias [+ residual]); B/scale/bias pre-padded."""
    M, K = a.shape
    b = pack["b"]
    Kb, Np = b.shape
    assert K == Kb, (K, Kb)
    N, tn = pack["n"], pack["tn"]
    tm, Mp = _choose_tm(M)

    a = a.astype(jnp.bfloat16)
    if Mp != M:
        a = jnp.pad(a, ((0, Mp - M), (0, 0)))

    args = [a, b, pack["s"], pack["c"]]
    in_specs = [
        pl.BlockSpec((tm, K), lambda i, j: (i, 0)),
        pl.BlockSpec((K, tn), lambda i, j: (0, j)),
        pl.BlockSpec((1, tn), lambda i, j: (0, j)),
        pl.BlockSpec((1, tn), lambda i, j: (0, j)),
    ]
    has_res = residual is not None
    if has_res:
        r = residual.astype(jnp.bfloat16)
        if r.shape != (Mp, Np):
            r = jnp.pad(r, ((0, Mp - r.shape[0]), (0, Np - r.shape[1])))
        args.append(r)
        in_specs.append(pl.BlockSpec((tm, tn), lambda i, j: (i, j)))

    grid = (Mp // tm, Np // tn)
    out_itemsize = jnp.dtype(out_dtype).itemsize
    cost = pl.CostEstimate(
        flops=2 * Mp * Np * K,
        transcendentals=0,
        bytes_accessed=Mp * K * 2 + K * Np * 2 + Mp * Np * out_itemsize
        + (Mp * Np * 2 if has_res else 0),
    )

    out = pl.pallas_call(
        functools.partial(_matmul_fused_kernel, relu, has_res),
        out_shape=jax.ShapeDtypeStruct((Mp, Np), out_dtype),
        grid_spec=pltpu.PrefetchScalarGridSpec(
            num_scalar_prefetch=0,
            grid=grid,
            in_specs=in_specs,
            out_specs=pl.BlockSpec((tm, tn), lambda i, j: (i, j)),
        ),
        compiler_params=pltpu.CompilerParams(
            dimension_semantics=("parallel", "parallel")),
        cost_estimate=cost,
    )(*args)

    if (Mp, Np) != (M, N):
        out = out[:M, :N]
    return out


# ----------------------------------------------------------------------------
# Plain-JAX glue: im2col, pooling
# ----------------------------------------------------------------------------
def extract_patches(x, kh, kw, stride, pad, pad_value=0.0):
    """x: NHWC -> (N, Ho, Wo, kh*kw*C); feature order (kh, kw, C) row-major."""
    # TODO(synk): fold the (kh,kw) taps into the matmul reduction (shifted-window
    # BlockSpecs) to avoid materializing the im2col tensor; kept in JAX glue here,
    # bf16 activations already halve the blowup.
    if pad > 0:
        x = jnp.pad(x, ((0, 0), (pad, pad), (pad, pad), (0, 0)),
                    constant_values=pad_value)
    N, H, W, C = x.shape
    Ho = (H - kh) // stride + 1
    Wo = (W - kw) // stride + 1
    cols = []
    for i in range(kh):
        for j in range(kw):
            cols.append(x[:, i:i + (Ho - 1) * stride + 1:stride,
                          j:j + (Wo - 1) * stride + 1:stride, :])
    return jnp.concatenate(cols, axis=-1)


def conv_bn_act(x, p, stride, pad, relu, residual=None):
    """Conv(bias=False) + folded BatchNorm (+ residual) (+ ReLU) via im2col + MXU."""
    kh, kw = p["kh"], p["kw"]
    if kh == 1 and kw == 1 and pad == 0:
        patches = x[:, ::stride, ::stride, :]
    else:
        patches = extract_patches(x, kh, kw, stride, pad)
    Nb, Ho, Wo, K = patches.shape
    a = patches.reshape(Nb * Ho * Wo, K)
    res2d = None
    if residual is not None:
        res2d = residual.reshape(Nb * Ho * Wo, residual.shape[-1])
    y = matmul_fused(a, p, relu, residual=res2d)
    return y.reshape(Nb, Ho, Wo, p["n"])


def maxpool_3x3_s2(x):
    # TODO(synk): max-pool reduction kept in plain JAX (negligible FLOPs vs convs).
    p = extract_patches(x, 3, 3, 2, 1, pad_value=-1e30)
    N, Ho, Wo, _ = p.shape
    C = x.shape[-1]
    return jnp.max(p.reshape(N, Ho, Wo, 9, C), axis=3)


# ----------------------------------------------------------------------------
# Deterministic parameter construction (synthetic, He-init conv weights,
# identity-ish BatchNorm folded into inference-form scale/bias).  Weights are
# padded/reshaped/bf16-cast ONCE here so the forward pass never copies them.
# ----------------------------------------------------------------------------
def _pack_weights(w2d, scale, bias, kh=1, kw=1):
    K, N = w2d.shape
    tn, Np = _choose_tn(N)
    b = jnp.pad(w2d, ((0, 0), (0, Np - N))).astype(jnp.bfloat16)
    s = jnp.pad(scale, (0, Np - N)).reshape(1, Np).astype(jnp.float32)
    c = jnp.pad(bias, (0, Np - N)).reshape(1, Np).astype(jnp.float32)
    return {"b": b, "s": s, "c": c, "n": N, "tn": tn, "kh": kh, "kw": kw}


class ParamGen:
    def __init__(self, key):
        self.key = key
        self.count = 0

    def _next(self):
        self.count += 1
        return jax.random.fold_in(self.key, self.count)

    def conv_bn(self, kh, kw, cin, cout):
        w = jax.random.normal(self._next(), (kh, kw, cin, cout), jnp.float32)
        w = w * np.sqrt(2.0 / (kh * kw * cin))
        gamma = jnp.ones((cout,), jnp.float32)
        beta = jnp.zeros((cout,), jnp.float32)
        mean = jnp.zeros((cout,), jnp.float32)
        var = jnp.ones((cout,), jnp.float32)
        scale = gamma / jnp.sqrt(var + BN_EPS)
        bias = beta - mean * scale
        return _pack_weights(w.reshape(kh * kw * cin, cout), scale, bias, kh, kw)

    def linear(self, cin, cout):
        w = jax.random.normal(self._next(), (cin, cout), jnp.float32)
        w = w * np.float32(1.0 / np.sqrt(cin))
        b = jnp.zeros((cout,), jnp.float32)
        return _pack_weights(w, jnp.ones((cout,), jnp.float32), b)


def make_bottleneck_params(gen, cin, planes, stride):
    p = {
        "c1": gen.conv_bn(1, 1, cin, planes),
        "c2": gen.conv_bn(3, 3, planes, planes),
        "c3": gen.conv_bn(1, 1, planes, planes * 4),
    }
    if stride != 1 or cin != planes * 4:
        p["down"] = gen.conv_bn(1, 1, cin, planes * 4)
    return p


LAYER_CFG = ((64, 3, 1), (128, 4, 2), (256, 6, 2), (512, 3, 2))


def make_resnet50_params(seed=0):
    gen = ParamGen(jax.random.PRNGKey(seed))
    params = {"conv1": gen.conv_bn(7, 7, 3, 64)}
    layers = []
    cin = 64
    for planes, blocks, stride in LAYER_CFG:
        layer = [make_bottleneck_params(gen, cin, planes, stride)]
        cin = planes * 4
        for _ in range(blocks - 1):
            layer.append(make_bottleneck_params(gen, cin, planes, 1))
        layers.append(layer)
    params["layers"] = layers
    params["fc"] = gen.linear(2048, 258)   # resnet50.fc replaced: Linear(2048, 258)
    return params


# ----------------------------------------------------------------------------
# Forward pass (ResNet50 with modified fc)
# ----------------------------------------------------------------------------
def bottleneck_forward(x, p, stride):
    identity = x
    out = conv_bn_act(x, p["c1"], 1, 0, True)
    out = conv_bn_act(out, p["c2"], stride, 1, True)
    if "down" in p:
        identity = conv_bn_act(x, p["down"], stride, 0, False)
    # Residual add + ReLU fused into the c3 matmul epilogue.
    out = conv_bn_act(out, p["c3"], 1, 0, True, residual=identity)
    return out


def base_model_forward(params, images_nchw):
    # images_nchw: (N, 3, H, W) float32 -> NHWC bf16 internally.
    x = jnp.transpose(images_nchw, (0, 2, 3, 1)).astype(jnp.bfloat16)
    x = conv_bn_act(x, params["conv1"], 2, 3, True)
    x = maxpool_3x3_s2(x)
    for layer_params, (_, _, stride) in zip(params["layers"], LAYER_CFG):
        for bi, p in enumerate(layer_params):
            x = bottleneck_forward(x, p, stride if bi == 0 else 1)
    x = jnp.mean(x.astype(jnp.float32), axis=(1, 2))  # adaptive avg pool -> (N, 2048)
    logits = matmul_fused(x.astype(jnp.bfloat16), params["fc"], relu=False,
                          out_dtype=jnp.float32)
    return logits  # (N, 258)


if __name__ == "__main__":
    key = jax.random.PRNGKey(0)
    images = jax.random.normal(key, (2, 3, 64, 64), jnp.float32)  # NCHW
    params = make_resnet50_params(seed=0)
    out = base_model_forward(params, images)
    out = jax.block_until_ready(out)
    assert out.shape == (2, 258), out.shape
    assert bool(jnp.all(jnp.isfinite(out)))
    print("KERNEL_OK")
</pallas_src>

<mosaic_0001>
module attributes {stable_mosaic.version = 11 : i64} {
  func.func @_matmul_fused_kernel(%arg0: i32, %arg1: i32, %arg2: memref<128x147xbf16, #tpu.memory_space<vmem>>, %arg3: memref<147x64xbf16, #tpu.memory_space<vmem>>, %arg4: memref<1x64xf32, #tpu.memory_space<vmem>>, %arg5: memref<1x64xf32, #tpu.memory_space<vmem>>, %arg6: memref<128x64xbf16, #tpu.memory_space<vmem>>) attributes {dimension_semantics = [#tpu.dimension_semantics<parallel>, #tpu.dimension_semantics<parallel>], iteration_bounds = array<i64: 16, 1>, scalar_prefetch = 0 : i64, scratch_operands = 0 : i64, tpu.core_type = #tpu.core_type<tc>, window_params = [{transform_indices = @transform_0, window_bounds = array<i64: 128, 147>}, {transform_indices = @transform_1, window_bounds = array<i64: 147, 64>}, {transform_indices = @transform_2, window_bounds = array<i64: 1, 64>}, {transform_indices = @transform_3, window_bounds = array<i64: 1, 64>}, {transform_indices = @transform_4, window_bounds = array<i64: 128, 64>}]} {
    %c0 = arith.constant 0 : index
    %c0_0 = arith.constant 0 : index
    %0 = vector.load %arg2[%c0, %c0_0] : memref<128x147xbf16, #tpu.memory_space<vmem>>, vector<128x147xbf16>
    %c0_1 = arith.constant 0 : index
    %c0_2 = arith.constant 0 : index
    %1 = vector.load %arg3[%c0_1, %c0_2] : memref<147x64xbf16, #tpu.memory_space<vmem>>, vector<147x64xbf16>
    %cst = arith.constant dense<0.000000e+00> : vector<128x64xf32>
    %2 = tpu.matmul %0, %1, %cst {dimension_numbers = #tpu.dot_dimension_numbers<[1], [0], [0], [1], [0, 0, 1, 1], [], []>} : vector<128x147xbf16>, vector<147x64xbf16>, vector<128x64xf32> -> vector<128x64xf32>
    %c0_3 = arith.constant 0 : index
    %c0_4 = arith.constant 0 : index
    %3 = vector.load %arg4[%c0_3, %c0_4] : memref<1x64xf32, #tpu.memory_space<vmem>>, vector<1x64xf32>
    %4 = vector.broadcast %3 : vector<1x64xf32> to vector<128x64xf32>
    %5 = arith.mulf %2, %4 : vector<128x64xf32>
    %c0_5 = arith.constant 0 : index
    %c0_6 = arith.constant 0 : index
    %6 = vector.load %arg5[%c0_5, %c0_6] : memref<1x64xf32, #tpu.memory_space<vmem>>, vector<1x64xf32>
    %7 = vector.broadcast %6 : vector<1x64xf32> to vector<128x64xf32>
    %8 = arith.addf %5, %7 : vector<128x64xf32>
    %cst_7 = arith.constant 0.000000e+00 : f32
    %9 = vector.broadcast %cst_7 : f32 to vector<128x64xf32>
    %10 = arith.maximumf %8, %9 : vector<128x64xf32>
    %11 = arith.truncf %10 : vector<128x64xf32> to vector<128x64xbf16>
    %c0_8 = arith.constant 0 : index
    %c0_9 = arith.constant 0 : index
    %12 = vector.load %arg6[%c0_8, %c0_9] : memref<128x64xbf16, #tpu.memory_space<vmem>>, vector<128x64xbf16>
    tpu.vector_store %arg6[%c0_8, %c0_9], %11 {strides = array<i32>} : memref<128x64xbf16, #tpu.memory_space<vmem>>, vector<128x64xbf16>,
    return
  }
  func.func @transform_0(%arg0: i32, %arg1: i32) -> (i32, i32) {
    %c0_i32 = arith.constant 0 : i32
    %c0_i32_0 = arith.constant 0 : i32
    return %arg0, %c0_i32 : i32, i32
  }
  func.func @transform_1(%arg0: i32, %arg1: i32) -> (i32, i32) {
    %c0_i32 = arith.constant 0 : i32
    %c0_i32_0 = arith.constant 0 : i32
    return %c0_i32, %arg1 : i32, i32
  }
  func.func @transform_2(%arg0: i32, %arg1: i32) -> (i32, i32) {
    %c0_i32 = arith.constant 0 : i32
    %c0_i32_0 = arith.constant 0 : i32
    return %c0_i32, %arg1 : i32, i32
  }
  func.func @transform_3(%arg0: i32, %arg1: i32) -> (i32, i32) {
    %c0_i32 = arith.constant 0 : i32
    %c0_i32_0 = arith.constant 0 : i32
    return %c0_i32, %arg1 : i32, i32
  }
  func.func @transform_4(%arg0: i32, %arg1: i32) -> (i32, i32) {
    %c0_i32 = arith.constant 0 : i32
    return %arg0, %arg1 : i32, i32
  }
}

</mosaic_0001>

<llo_original>
// kernel: tpu_custom_call.1
$region0: #{tpu_custom_call.1}
  #allocation0 [shape = 'u32[]', space=smem, size = 0x4, offset = 0x4, fixed_abs, tag = 'smem constant byte address 0x4 - core index']
  #allocation1 [shape = 'u32[144,128]{1,0:T(1,128)}', space=vmem, size = 0x12000, scoped, tag = 'internal scratch']
  %s0 = inlined_call_operand.vmem [shape: bf16[2048,147], index: 0, kind: input, shape index: {}]
  %s1 = inlined_call_operand.vmem [shape: bf16[147,64], index: 1, kind: input, shape index: {}]
  %s2 = inlined_call_operand.vmem [shape: f32[1,64], index: 2, kind: input, shape index: {}]
  %s3 = inlined_call_operand.vmem [shape: f32[1,64], index: 3, kind: input, shape index: {}]
  %s4 = inlined_call_operand.vmem [shape: bf16[2048,64], index: 4, kind: output, shape index: {}]
  %s5 = sld [smem:[#allocation0]]
  $region49: #{tpu_custom_call.1} parent=0
    _
  %s7 = ssub.s32 1, %s5
  %s8 = scalar_select 0, %s7, %s5
  loop: start=0, step=1, limit=18
  $region2: #{tpu_custom_call.1} parent=0 // loop_pre_header
    _
  $region3: #{tpu_custom_call.1} parent=0 // loop_header
    %s10 = sphi 0, %s14
    %p11 = scmp.ge.s32.totalorder %s10, 18
    %s17 = sphi 0, %s29
    %s18 = sphi 0, %s25
    %s19 = sphi 0, %s17
    %s20 = sphi 0, %s18
    %s21 = sphi 0, %s19
    %s22 = sphi 0, %s20
    %s32 = sphi 0, %s34
    %s35 = sphi 0, %s32
    %s36 = sphi 0, %s35
    %s52 = sphi 0, %s36
    %s58 = sphi 0, %s60
    %s61 = sphi 0, %s58
    %s62 = sphi 0, %s61
    %s78 = sphi 0, %s62
    %s84 = sphi 0, %s86
    %s87 = sphi 0, %s84
    %s88 = sphi 0, %s87
    %s104 = sphi 0, %s88
    %s110 = sphi 0, %s112
    %s113 = sphi 0, %s110
    %s114 = sphi 0, %s113
    %s130 = sphi 0, %s114
    %s138 = sphi 0, %s140
    %s141 = sphi 0, %s138
    %s142 = sphi 0, %s141
    %s158 = sphi 0, %s142
  $region4: #{tpu_custom_call.1} parent=0 // loop_header_branch
    %13 = sbr.rel (%p11) target = $region8
  $region5: #{tpu_custom_call.1} parent=0 // loop_body
    %s15 = ssub.s32 %s10, 1
    %s16 = ssub.s32 %s10, 2
    %s23 = sadd.s32 1, %s18
    %p24 = scmp.ge.s32.totalorder %s23, 1
    %s25 = scalar_select %p24, 0, %s23
    %s26 = sadd.s32 1, %s17
    %s27 = scalar_select %p24, %s26, %s17
    %p28 = scmp.ge.s32.totalorder %s27, 16
    %s29 = scalar_select %p28, 0, %s27
    %s30 = ssub.s32 %s17, %s29
    %p31 = scmp.eq.s32.totalorder %s30, 0
    %s33 = sadd.s32 %s32, 1
    %s34 = scalar_select %p31, %s32, %s33
    %p37 = pneg %p31
    %p38 = scmp.eq.s32.totalorder %s10, 15
    %p39 = por %p37, %p38
    %p40 = scmp.ne.s32.totalorder %s32, %s35
    %p41 = scmp.eq.s32.totalorder %s10, 0
    %p42 = por %p40, %p41
    %p43 = scmp.ne.s32.totalorder %s32, %s35
    %p44 = scmp.eq.s32.totalorder %s15, 15
    %p45 = por %p43, %p44
    %p46 = scmp.ne.s32.totalorder %s35, %s36
    %p47 = scmp.eq.s32.totalorder %s15, 0
    %p48 = por %p46, %p47
    %p49 = scmp.ne.s32.totalorder %s35, %s36
    %p50 = scmp.eq.s32.totalorder %s16, 15
    %p51 = por %p49, %p50
    %p53 = scmp.ne.s32.totalorder %s36, %s52
    %p54 = scmp.eq.s32.totalorder %s16, 0
    %p55 = por %p53, %p54
    %s56 = ssub.s32 %s18, %s25
    %p57 = scmp.eq.s32.totalorder %s56, 0
    %s59 = sadd.s32 %s58, 1
    %s60 = scalar_select %p57, %s58, %s59
    %p63 = pneg %p57
    %p64 = scmp.eq.s32.totalorder %s10, 15
    %p65 = por %p63, %p64
    %p66 = scmp.ne.s32.totalorder %s58, %s61
    %p67 = scmp.eq.s32.totalorder %s10, 0
    %p68 = por %p66, %p67
    %p69 = scmp.ne.s32.totalorder %s58, %s61
    %p70 = scmp.eq.s32.totalorder %s15, 15
    %p71 = por %p69, %p70
    %p72 = scmp.ne.s32.totalorder %s61, %s62
    %p73 = scmp.eq.s32.totalorder %s15, 0
    %p74 = por %p72, %p73
    %p75 = scmp.ne.s32.totalorder %s61, %s62
    %p76 = scmp.eq.s32.totalorder %s16, 15
    %p77 = por %p75, %p76
    %p79 = scmp.ne.s32.totalorder %s62, %s78
    %p80 = scmp.eq.s32.totalorder %s16, 0
    %p81 = por %p79, %p80
    %s82 = ssub.s32 %s18, %s25
    %p83 = scmp.eq.s32.totalorder %s82, 0
    %s85 = sadd.s32 %s84, 1
    %s86 = scalar_select %p83, %s84, %s85
    %p89 = pneg %p83
    %p90 = scmp.eq.s32.totalorder %s10, 15
    %p91 = por %p89, %p90
    %p92 = scmp.ne.s32.totalorder %s84, %s87
    %p93 = scmp.eq.s32.totalorder %s10, 0
    %p94 = por %p92, %p93
    %p95 = scmp.ne.s32.totalorder %s84, %s87
    %p96 = scmp.eq.s32.totalorder %s15, 15
    %p97 = por %p95, %p96
    %p98 = scmp.ne.s32.totalorder %s87, %s88
    %p99 = scmp.eq.s32.totalorder %s15, 0
    %p100 = por %p98, %p99
    %p101 = scmp.ne.s32.totalorder %s87, %s88
    %p102 = scmp.eq.s32.totalorder %s16, 15
    %p103 = por %p101, %p102
    %p105 = scmp.ne.s32.totalorder %s88, %s104
    %p106 = scmp.eq.s32.totalorder %s16, 0
    %p107 = por %p105, %p106
    %s108 = ssub.s32 %s18, %s25
    %p109 = scmp.eq.s32.totalorder %s108, 0
    %s111 = sadd.s32 %s110, 1
    %s112 = scalar_select %p109, %s110, %s111
    %p115 = pneg %p109
    %p116 = scmp.eq.s32.totalorder %s10, 15
    %p117 = por %p115, %p116
    %p118 = scmp.ne.s32.totalorder %s110, %s113
    %p119 = scmp.eq.s32.totalorder %s10, 0
    %p120 = por %p118, %p119
    %p121 = scmp.ne.s32.totalorder %s110, %s113
    %p122 = scmp.eq.s32.totalorder %s15, 15
    %p123 = por %p121, %p122
    %p124 = scmp.ne.s32.totalorder %s113, %s114
    %p125 = scmp.eq.s32.totalorder %s15, 0
    %p126 = por %p124, %p125
    %p127 = scmp.ne.s32.totalorder %s113, %s114
    %p128 = scmp.eq.s32.totalorder %s16, 15
    %p129 = por %p127, %p128
    %p131 = scmp.ne.s32.totalorder %s114, %s130
    %p132 = scmp.eq.s32.totalorder %s16, 0
    %p133 = por %p131, %p132
    %s134 = ssub.s32 %s17, %s29
    %s135 = ssub.s32 %s18, %s25
    %s136 = sor.u32 %s134, %s135
    %p137 = scmp.eq.s32.totalorder %s136, 0
    %s139 = sadd.s32 %s138, 1
    %s140 = scalar_select %p137, %s138, %s139
    %p143 = pneg %p137
    %p144 = scmp.eq.s32.totalorder %s10, 15
    %p145 = por %p143, %p144
    %p146 = scmp.ne.s32.totalorder %s138, %s141
    %p147 = scmp.eq.s32.totalorder %s10, 0
    %p148 = por %p146, %p147
    %p149 = scmp.ne.s32.totalorder %s138, %s141
    %p150 = scmp.eq.s32.totalorder %s15, 15
    %p151 = por %p149, %p150
    %p152 = scmp.ne.s32.totalorder %s141, %s142
    %p153 = scmp.eq.s32.totalorder %s15, 0
    %p154 = por %p152, %p153
    %p155 = scmp.ne.s32.totalorder %s141, %s142
    %p156 = scmp.eq.s32.totalorder %s16, 15
    %p157 = por %p155, %p156
    %p159 = scmp.ne.s32.totalorder %s142, %s158
    %p160 = scmp.eq.s32.totalorder %s16, 0
    %p161 = por %p159, %p160
    %p162 = scmp.le.s32.totalorder 1, %s10
    %p163 = scmp.lt.s32.totalorder %s10, 17
    %p164 = pnand %p162, %p163
    %p165 = pneg %p164
    // Predicated region
    $region9: #{tpu_custom_call.1} parent=5 // pred_check
      _
    $region10: #{tpu_custom_call.1} parent=5 // pred_check_branch
      %167 = sbr.rel (%p164) target = $region12
    $region11: #{tpu_custom_call.1} parent=5 // pred_region
      %s168 = ssub.s32 %s10, 1
      // Predicated region
      $region13: #{tpu_custom_call.1} parent=11 // pred_check
        %p169 = pneg %p74
      $region14: #{tpu_custom_call.1} parent=11 // pred_check_branch
        %171 = sbr.rel (%p169) target = $region16
      $region15: #{tpu_custom_call.1} parent=11 // pred_region
        %p172 = scmp.lt.s32.totalorder %s20, 0
        %s173 = scalar_select %p172, %s20, 0
        %s174 = smul.addr %s173, 4
        %s175 = scalar_lea.vmem %s1, %s174
      $region16: #{tpu_custom_call.1} parent=11 // pred_fallthru
        _
      // Predicated region
      $region17: #{tpu_custom_call.1} parent=11 // pred_check
        %p176 = pneg %p100
      $region18: #{tpu_custom_call.1} parent=11 // pred_check_branch
        %178 = sbr.rel (%p176) target = $region20
      $region19: #{tpu_custom_call.1} parent=11 // pred_region
        %p179 = scmp.lt.s32.totalorder %s20, 0
        %s180 = scalar_select %p179, %s20, 0
        %s181 = scalar_lea.vmem %s2, %s180
      $region20: #{tpu_custom_call.1} parent=11 // pred_fallthru
        _
      // Predicated region
      $region21: #{tpu_custom_call.1} parent=11 // pred_check
        %p182 = pneg %p126
      $region22: #{tpu_custom_call.1} parent=11 // pred_check_branch
        %184 = sbr.rel (%p182) target = $region24
      $region23: #{tpu_custom_call.1} parent=11 // pred_region
        %p185 = scmp.lt.s32.totalorder %s20, 0
        %s186 = scalar_select %p185, %s20, 0
        %s187 = scalar_lea.vmem %s3, %s186
      $region24: #{tpu_custom_call.1} parent=11 // pred_fallthru
        _
    $region12: #{tpu_custom_call.1} parent=5 // pred_fallthru
      _
    %p188 = scmp.lt.s32.totalorder %s10, 16
    // Predicated region
    $region25: #{tpu_custom_call.1} parent=5 // pred_check
      %p189 = pneg %p188
    $region26: #{tpu_custom_call.1} parent=5 // pred_check_branch
      %191 = sbr.rel (%p189) target = $region28
    $region27: #{tpu_custom_call.1} parent=5 // pred_region
      // Predicated region
      $region29: #{tpu_custom_call.1} parent=27 // pred_check
        %p192 = pneg %p42
      $region30: #{tpu_custom_call.1} parent=27 // pred_check_branch
        %194 = sbr.rel (%p192) target = $region32
      $region31: #{tpu_custom_call.1} parent=27 // pred_region
        %s195 = smul.u32 16, %s17
        %p196 = scmp.lt.s32.totalorder %s195, 255
        %s197 = scalar_select %p196, %s195, 255
        %s198 = smul.addr %s197, 2
        %s199 = smul.addr %s198, 4
        %s200 = scalar_lea.vmem %s0, %s199
        %s201 = smul.u32 16, %s17
      $region32: #{tpu_custom_call.1} parent=27 // pred_fallthru
        _
    $region28: #{tpu_custom_call.1} parent=5 // pred_fallthru
      _
    %p202 = scmp.le.s32.totalorder 1, %s10
    %p203 = scmp.lt.s32.totalorder %s10, 17
    %p204 = pnand %p202, %p203
    %p205 = pneg %p204
    // Predicated region
    $region33: #{tpu_custom_call.1} parent=5 // pred_check
      _
    $region34: #{tpu_custom_call.1} parent=5 // pred_check_branch
      %207 = sbr.rel (%p204) target = $region36
    $region35: #{tpu_custom_call.1} parent=5 // pred_region
      %s208 = ssub.s32 %s10, 1
      %s209 = smul.u32 16, %s19
      %p210 = scmp.lt.s32.totalorder %s209, 255
      %s211 = scalar_select %p210, %s209, 255
      %s212 = smul.addr %s211, 2
      %s213 = smul.addr %s212, 4
      %s214 = scalar_lea.vmem %s0, %s213
      %p215 = pneg %p48
      %p216 = pneg %p45
      %p217 = scmp.lt.s32.totalorder %s20, 0
      %s218 = scalar_select %p217, %s20, 0
      %s219 = smul.addr %s218, 4
      %s220 = scalar_lea.vmem %s1, %s219
      %p221 = pneg %p74
      %p222 = pneg %p71
      %p223 = scmp.lt.s32.totalorder %s20, 0
      %s224 = scalar_select %p223, %s20, 0
      %s225 = scalar_lea.vmem %s2, %s224
      %p226 = pneg %p100
      %p227 = pneg %p97
      %p228 = scmp.lt.s32.totalorder %s20, 0
      %s229 = scalar_select %p228, %s20, 0
      %s230 = scalar_lea.vmem %s3, %s229
      %p231 = pneg %p126
      %p232 = pneg %p123
      %p233 = pneg %p154
      %p234 = pneg %p151
      %s235 = smul.u32 16, %s19
      %p236 = scmp.lt.s32.totalorder %s235, 255
      %s237 = scalar_select %p236, %s235, 255
      %p238 = scmp.lt.s32.totalorder %s20, 0
      %s239 = scalar_select %p238, %s20, 0
      %s240 = sadd.s32 %s239, %s237
      %s241 = smul.addr %s240, 4
      %s242 = scalar_lea.vmem %s4, %s241
      %s243 = smul.u32 16, %s19
      %p244 = scmp.lt.s32.totalorder %s243, 255
      %s245 = scalar_select %p244, %s243, 255
      %s246 = smul.addr %s245, 2
      %s247 = smul.addr %s246, 4
      %s248 = scalar_lea.vmem %s0, %s247
      %s249 = smul.u32 16, %s19
      %p250 = scmp.lt.s32.totalorder %s20, 0
      %s251 = scalar_select %p250, %s20, 0
      %s252 = smul.addr %s251, 4
      %s253 = scalar_lea.vmem %s1, %s252
      %p254 = scmp.lt.s32.totalorder %s20, 0
      %s255 = scalar_select %p254, %s20, 0
      %s256 = scalar_lea.vmem %s2, %s255
      %p257 = scmp.lt.s32.totalorder %s20, 0
      %s258 = scalar_select %p257, %s20, 0
      %s259 = scalar_lea.vmem %s3, %s258
      %s260 = smul.u32 16, %s19
      %p261 = scmp.lt.s32.totalorder %s260, 255
      %s262 = scalar_select %p261, %s260, 255
      %p263 = scmp.lt.s32.totalorder %s20, 0
      %s264 = scalar_select %p263, %s20, 0
      %s265 = sadd.s32 %s264, %s262
      %s266 = smul.addr %s265, 4
      %s267 = scalar_lea.vmem %s4, %s266
      %s268 = smul.u32 16, %s19
      %v270 = vld [vmem:[%s248] sm:$0xff]
      %v271 = vld [vmem:[%s248 + $0x8] sm:$0xff]
      %v272 = vld [vmem:[%s248 + $0x10] sm:$0xff]
      %v273 = vld [vmem:[%s248 + $0x18] sm:$0xff]
      %v274 = vld [vmem:[%s248 + $0x20] sm:$0xff]
      %v275 = vld [vmem:[%s248 + $0x28] sm:$0xff]
      %v276 = vld [vmem:[%s248 + $0x30] sm:$0xff]
      %v277 = vld [vmem:[%s248 + $0x38] sm:$0xff]
      %v278 = vld [vmem:[%s248 + $0x40] sm:$0xff]
      %v279 = vld [vmem:[%s248 + $0x48] sm:$0xff]
      %v280 = vld [vmem:[%s248 + $0x50] sm:$0xff]
      %v281 = vld [vmem:[%s248 + $0x58] sm:$0xff]
      %v282 = vld [vmem:[%s248 + $0x60] sm:$0xff]
      %v283 = vld [vmem:[%s248 + $0x68] sm:$0xff]
      %v284 = vld [vmem:[%s248 + $0x70] sm:$0xff]
      %v285 = vld [vmem:[%s248 + $0x78] sm:$0xff]
      %v286 = vld [vmem:[%s253] sm:$0xf]
      %v287 = vld [vmem:[%s253 + $0x4] sm:$0xf]
      %v288 = vld [vmem:[%s253 + $0x8] sm:$0xf]
      %v289 = vld [vmem:[%s253 + $0xc] sm:$0xf]
      %v290 = vld [vmem:[%s253 + $0x10] sm:$0xf]
      %v291 = vld [vmem:[%s253 + $0x14] sm:$0xf]
      %v292 = vld [vmem:[%s253 + $0x18] sm:$0xf]
      %v293 = vld [vmem:[%s253 + $0x1c] sm:$0xf]
      %v294 = vld [vmem:[%s253 + $0x20] sm:$0xf]
      %v295 = vld [vmem:[%s253 + $0x24] sm:$0xf]
      %v296 = vld [vmem:[%s253 + $0x28] sm:$0xf]
      %v297 = vld [vmem:[%s253 + $0x2c] sm:$0xf]
      %v298 = vld [vmem:[%s253 + $0x30] sm:$0xf]
      %v299 = vld [vmem:[%s253 + $0x34] sm:$0xf]
      %v300 = vld [vmem:[%s253 + $0x38] sm:$0xf]
      %v301 = vld [vmem:[%s253 + $0x3c] sm:$0xf]
      %v302 = vld [vmem:[%s253 + $0x40] sm:$0xf]
      %v303 = vld [vmem:[%s253 + $0x44] sm:$0xf]
      %v304 = vld [vmem:[%s253 + $0x48] sm:$0x3]
      %v321 = vunpack.c.l.b16 %v270
      %v322 = vunpack.c.h.b16 %v270
      %v323 = vunpack.c.l.b16 %v271
      %v324 = vunpack.c.h.b16 %v271
      %v325 = vunpack.c.l.b16 %v272
      %v326 = vunpack.c.h.b16 %v272
      %v327 = vunpack.c.l.b16 %v273
      %v328 = vunpack.c.h.b16 %v273
      %v329 = vunpack.c.l.b16 %v274
      %v330 = vunpack.c.h.b16 %v274
      %v331 = vunpack.c.l.b16 %v275
      %v332 = vunpack.c.h.b16 %v275
      %v333 = vunpack.c.l.b16 %v276
      %v334 = vunpack.c.h.b16 %v276
      %v335 = vunpack.c.l.b16 %v277
      %v336 = vunpack.c.h.b16 %v277
      %v337 = vunpack.c.l.b16 %v278
      %v338 = vunpack.c.h.b16 %v278
      %v339 = vunpack.c.l.b16 %v279
      %v340 = vunpack.c.h.b16 %v279
      %v341 = vunpack.c.l.b16 %v280
      %v342 = vunpack.c.h.b16 %v280
      %v343 = vunpack.c.l.b16 %v281
      %v344 = vunpack.c.h.b16 %v281
      %v345 = vunpack.c.l.b16 %v282
      %v346 = vunpack.c.h.b16 %v282
      %v347 = vunpack.c.l.b16 %v283
      %v348 = vunpack.c.h.b16 %v283
      %v349 = vunpack.c.l.b16 %v284
      %v350 = vunpack.c.h.b16 %v284
      %v351 = vunpack.c.l.b16 %v285
      %v352 = vunpack.c.h.b16 %v285
      %v353 = vpack.c.b16 %v323, %v321
      %v354 = vpack.c.b16 %v324, %v322
      %v355 = vpack.c.b16 %v327, %v325
      %v356 = vpack.c.b16 %v328, %v326
      %v357 = vpack.c.b16 %v331, %v329
      %v358 = vpack.c.b16 %v332, %v330
      %v359 = vpack.c.b16 %v335, %v333
      %v360 = vpack.c.b16 %v336, %v334
      %v361 = vpack.c.b16 %v339, %v337
      %v362 = vpack.c.b16 %v340, %v338
      %v363 = vpack.c.b16 %v343, %v341
      %v364 = vpack.c.b16 %v344, %v342
      %v365 = vpack.c.b16 %v347, %v345
      %v366 = vpack.c.b16 %v348, %v346
      %v367 = vpack.c.b16 %v351, %v349
      %v368 = vpack.c.b16 %v352, %v350
      %v396 = vunpack.c.l.b16 %v286
      %v397 = vunpack.c.l.b16 %v287
      %v398 = vunpack.c.l.b16 %v288
      %v399 = vunpack.c.l.b16 %v289
      %v400 = vunpack.c.l.b16 %v290
      %v401 = vunpack.c.l.b16 %v291
      %v402 = vunpack.c.l.b16 %v292
      %v403 = vunpack.c.l.b16 %v293
      %v404 = vunpack.c.l.b16 %v294
      %v405 = vunpack.c.l.b16 %v295
      %v406 = vunpack.c.l.b16 %v296
      %v407 = vunpack.c.l.b16 %v297
      %v408 = vunpack.c.l.b16 %v298
      %v409 = vunpack.c.l.b16 %v299
      %v410 = vunpack.c.l.b16 %v300
      %v411 = vunpack.c.l.b16 %v301
      %v412 = vunpack.c.l.b16 %v302
      %v413 = vunpack.c.l.b16 %v303
      %v414 = vunpack.c.l.b16 %v304
      %v415 = vpack.c.b16 %v397, %v396
      %v416 = vpack.c.b16 %v399, %v398
      %v417 = vpack.c.b16 %v401, %v400
      %v418 = vpack.c.b16 %v403, %v402
      %v419 = vpack.c.b16 %v405, %v404
      %v420 = vpack.c.b16 %v407, %v406
      %v421 = vpack.c.b16 %v409, %v408
      %v422 = vpack.c.b16 %v411, %v410
      %v423 = vpack.c.b16 %v413, %v412
      %v424 = vpack.c.b16 %v414, %v414
      %vm434 = vcmask 154624
      %v436 = vsel %vm434, %v354, 0
      %v439 = vsel %vm434, %v356, 0
      %v442 = vsel %vm434, %v358, 0
      %v445 = vsel %vm434, %v360, 0
      %v448 = vsel %vm434, %v362, 0
      %v451 = vsel %vm434, %v364, 0
      %v454 = vsel %vm434, %v366, 0
      %v457 = vsel %vm434, %v368, 0
      %vm459 = vcmask 1040384
      %vm460 = vcmask 1041408
      %v461 = vsel %vm459, 4294967295, 65535
      %v462 = vsel %vm460, %v461, 0
      %v464 = vand.u32 %v424, %v462
      %466 = vmatprep.subr.bf16.mxu0 0
      %467 = vmatpush1.bf16.msra.mxu0 %v415
      %468 = vmatprep.subr.bf16.mxu0 0
      %469 = vmatpush1.bf16.msra.mxu0 %v416
      %470 = vmatprep.subr.bf16.mxu0 0
      %471 = vmatpush1.bf16.msra.mxu0 %v417
      %472 = vmatprep.subr.bf16.mxu0 0
      %473 = vmatpush1.bf16.msra.mxu0 %v418
      %474 = vmatprep.subr.bf16.mxu0 0
      %475 = vmatpush1.bf16.msra.mxu0 %v419
      %476 = vmatprep.subr.bf16.mxu0 0
      %477 = vmatpush1.bf16.msra.mxu0 %v420
      %478 = vmatprep.subr.bf16.mxu0 0
      %479 = vmatpush1.bf16.msra.mxu0 %v421
      %480 = vmatprep.subr.bf16.mxu0 0
      %481 = vmatpush1.bf16.msra.mxu0 %v422
      %482 = vmatprep.subr.bf16.mxu0 0
      %483 = vmatpush1.bf16.msra.mxu0 %v423
      %484 = vmatprep.subr.bf16.mxu0 0
      %485 = vmatpush1.bf16.msra.mxu0 %v464
      %486 = vmatprep.subr.bf16.mxu0 0
      %487 = vmatpush1.bf16.msra.mxu0 0
      %488 = vmatprep.subr.bf16.mxu0 0
      %489 = vmatpush1.bf16.msra.mxu0 0
      %490 = vmatprep.subr.bf16.mxu0 0
      %491 = vmatpush1.bf16.msra.mxu0 0
      %492 = vmatprep.subr.bf16.mxu0 0
      %493 = vmatpush1.bf16.msra.mxu0 0
      %494 = vmatprep.subr.bf16.mxu0 0
      %495 = vmatpush1.bf16.msra.mxu0 0
      %496 = vmatprep.subr.bf16.mxu0 0
      %497 = vmatpush1.bf16.msra.mxu0 0
      %498 = vmatprep.mubr.bf16.mxu0 %v436
      %499 = vmatmul.mubr.bf16.gmra.mrb[0].mxu0 %v353
      %v500 = vpop.f32.mrb[0].mxu0
      %v501 = vadd.f32 0.0, %v500
      %v502 = vpop.f32.mrb[0].mxu0
      %v503 = vpop.f32.mrb[0].mxu0
      %v504 = vadd.f32 0.0, %v503
      %v505 = vpop.f32.mrb[0].mxu0
      %506 = vmatprep.mubr.bf16.mxu0 %v439
      %507 = vmatmul.mubr.bf16.gmra.mrb[0].mxu0 %v355
      %v508 = vpop.f32.mrb[0].mxu0
      %v509 = vadd.f32 0.0, %v508
      %v510 = vpop.f32.mrb[0].mxu0
      %v511 = vpop.f32.mrb[0].mxu0
      %v512 = vadd.f32 0.0, %v511
      %v513 = vpop.f32.mrb[0].mxu0
      %514 = vmatprep.mubr.bf16.mxu0 %v442
      %515 = vmatmul.mubr.bf16.gmra.mrb[0].mxu0 %v357
      %v516 = vpop.f32.mrb[0].mxu0
      %v517 = vadd.f32 0.0, %v516
      %v518 = vpop.f32.mrb[0].mxu0
      %v519 = vpop.f32.mrb[0].mxu0
      %v520 = vadd.f32 0.0, %v519
      %v521 = vpop.f32.mrb[0].mxu0
      %522 = vmatprep.mubr.bf16.mxu0 %v445
      %523 = vmatmul.mubr.bf16.gmra.mrb[0].mxu0 %v359
      %v524 = vpop.f32.mrb[0].mxu0
      %v525 = vadd.f32 0.0, %v524
      %v526 = vpop.f32.mrb[0].mxu0
      %v527 = vpop.f32.mrb[0].mxu0
      %v528 = vadd.f32 0.0, %v527
      %v529 = vpop.f32.mrb[0].mxu0
      %530 = vmatprep.mubr.bf16.mxu0 %v448
      %531 = vmatmul.mubr.bf16.gmra.mrb[0].mxu0 %v361
      %v532 = vpop.f32.mrb[0].mxu0
      %v533 = vadd.f32 0.0, %v532
      %v534 = vpop.f32.mrb[0].mxu0
      %v535 = vpop.f32.mrb[0].mxu0
      %v536 = vadd.f32 0.0, %v535
      %v537 = vpop.f32.mrb[0].mxu0
      %538 = vmatprep.mubr.bf16.mxu0 %v451
      %539 = vmatmul.mubr.bf16.gmra.mrb[0].mxu0 %v363
      %v540 = vpop.f32.mrb[0].mxu0
      %v541 = vadd.f32 0.0, %v540
      %v542 = vpop.f32.mrb[0].mxu0
      %v543 = vpop.f32.mrb[0].mxu0
      %v544 = vadd.f32 0.0, %v543
      %v545 = vpop.f32.mrb[0].mxu0
      %546 = vmatprep.mubr.bf16.mxu0 %v454
      %547 = vmatmul.mubr.bf16.gmra.mrb[0].mxu0 %v365
      %v548 = vpop.f32.mrb[0].mxu0
      %v549 = vadd.f32 0.0, %v548
      %v550 = vpop.f32.mrb[0].mxu0
      %v551 = vpop.f32.mrb[0].mxu0
      %v552 = vadd.f32 0.0, %v551
      %v553 = vpop.f32.mrb[0].mxu0
      %554 = vmatprep.mubr.bf16.mxu0 %v457
      %555 = vmatmul.mubr.bf16.gmra.mrb[0].mxu0 %v367
      %v556 = vpop.f32.mrb[0].mxu0
      %v557 = vadd.f32 0.0, %v556
      %v558 = vpop.f32.mrb[0].mxu0
      %v559 = vpop.f32.mrb[0].mxu0
      %v560 = vadd.f32 0.0, %v559
      %v561 = vpop.f32.mrb[0].mxu0
      %562 = vdwg.mxu0
      %v563 = vld [vmem:[%s256] sm:$0x1]
      %v565 = vlaneseq
      %v566 = vshrl.u32 %v565, 7
      %v567 = vsub.s32 0, %v566
      %v568 = vrot.slane %v563, %v567
      %v570 = vmul.f32 %v501, %v568
      %v571 = vmul.f32 %v504, %v568
      %v572 = vmul.f32 %v509, %v568
      %v573 = vmul.f32 %v512, %v568
      %v574 = vmul.f32 %v517, %v568
      %v575 = vmul.f32 %v520, %v568
      %v576 = vmul.f32 %v525, %v568
      %v577 = vmul.f32 %v528, %v568
      %v578 = vmul.f32 %v533, %v568
      %v579 = vmul.f32 %v536, %v568
      %v580 = vmul.f32 %v541, %v568
      %v581 = vmul.f32 %v544, %v568
      %v582 = vmul.f32 %v549, %v568
      %v583 = vmul.f32 %v552, %v568
      %v584 = vmul.f32 %v557, %v568
      %v585 = vmul.f32 %v560, %v568
      %v586 = vld [vmem:[%s259] sm:$0x1]
      %v588 = vlaneseq
      %v589 = vshrl.u32 %v588, 7
      %v590 = vsub.s32 0, %v589
      %v591 = vrot.slane %v586, %v590
      %v593 = vadd.f32 %v570, %v591
      %v594 = vadd.f32 %v571, %v591
      %v595 = vadd.f32 %v572, %v591
      %v596 = vadd.f32 %v573, %v591
      %v597 = vadd.f32 %v574, %v591
      %v598 = vadd.f32 %v575, %v591
      %v599 = vadd.f32 %v576, %v591
      %v600 = vadd.f32 %v577, %v591
      %v601 = vadd.f32 %v578, %v591
      %v602 = vadd.f32 %v579, %v591
      %v603 = vadd.f32 %v580, %v591
      %v604 = vadd.f32 %v581, %v591
      %v605 = vadd.f32 %v582, %v591
      %v606 = vadd.f32 %v583, %v591
      %v607 = vadd.f32 %v584, %v591
      %v608 = vadd.f32 %v585, %v591
      %v609 = vmax.f32 %v593, 0.0
      %v610 = vmax.f32 %v594, 0.0
      %v611 = vmax.f32 %v595, 0.0
      %v612 = vmax.f32 %v596, 0.0
      %v613 = vmax.f32 %v597, 0.0
      %v614 = vmax.f32 %v598, 0.0
      %v615 = vmax.f32 %v599, 0.0
      %v616 = vmax.f32 %v600, 0.0
      %v617 = vmax.f32 %v601, 0.0
      %v618 = vmax.f32 %v602, 0.0
      %v619 = vmax.f32 %v603, 0.0
      %v620 = vmax.f32 %v604, 0.0
      %v621 = vmax.f32 %v605, 0.0
      %v622 = vmax.f32 %v606, 0.0
      %v623 = vmax.f32 %v607, 0.0
      %v624 = vmax.f32 %v608, 0.0
      %v625 = vpack.c.bf16 %v610, %v609
      %v626 = vpack.c.bf16 %v612, %v611
      %v627 = vpack.c.bf16 %v614, %v613
      %v628 = vpack.c.bf16 %v616, %v615
      %v629 = vpack.c.bf16 %v618, %v617
      %v630 = vpack.c.bf16 %v620, %v619
      %v631 = vpack.c.bf16 %v622, %v621
      %v632 = vpack.c.bf16 %v624, %v623
      %v641 = vunpack.c.l.b16 %v625
      %v642 = vunpack.c.h.b16 %v625
      %v643 = vunpack.c.l.b16 %v626
      %v644 = vunpack.c.h.b16 %v626
      %v645 = vunpack.c.l.b16 %v627
      %v646 = vunpack.c.h.b16 %v627
      %v647 = vunpack.c.l.b16 %v628
      %v648 = vunpack.c.h.b16 %v628
      %v649 = vunpack.c.l.b16 %v629
      %v650 = vunpack.c.h.b16 %v629
      %v651 = vunpack.c.l.b16 %v630
      %v652 = vunpack.c.h.b16 %v630
      %v653 = vunpack.c.l.b16 %v631
      %v654 = vunpack.c.h.b16 %v631
      %v655 = vunpack.c.l.b16 %v632
      %v656 = vunpack.c.h.b16 %v632
      %v657 = vpack.c.b16 %v641, %v641
      %v658 = vpack.c.b16 %v642, %v642
      %v659 = vpack.c.b16 %v643, %v643
      %v660 = vpack.c.b16 %v644, %v644
      %v661 = vpack.c.b16 %v645, %v645
      %v662 = vpack.c.b16 %v646, %v646
      %v663 = vpack.c.b16 %v647, %v647
      %v664 = vpack.c.b16 %v648, %v648
      %v665 = vpack.c.b16 %v649, %v649
      %v666 = vpack.c.b16 %v650, %v650
      %v667 = vpack.c.b16 %v651, %v651
      %v668 = vpack.c.b16 %v652, %v652
      %v669 = vpack.c.b16 %v653, %v653
      %v670 = vpack.c.b16 %v654, %v654
      %v671 = vpack.c.b16 %v655, %v655
      %v672 = vpack.c.b16 %v656, %v656
      %vm689 = vcmask 519168
      %690 = vst.msk [vmem:[%s267] sm:$0xf] %vm689, %v657
      %691 = vst.msk [vmem:[%s267 + $0x4] sm:$0xf] %vm689, %v658
      %692 = vst.msk [vmem:[%s267 + $0x8] sm:$0xf] %vm689, %v659
      %693 = vst.msk [vmem:[%s267 + $0xc] sm:$0xf] %vm689, %v660
      %694 = vst.msk [vmem:[%s267 + $0x10] sm:$0xf] %vm689, %v661
      %695 = vst.msk [vmem:[%s267 + $0x14] sm:$0xf] %vm689, %v662
      %696 = vst.msk [vmem:[%s267 + $0x18] sm:$0xf] %vm689, %v663
      %697 = vst.msk [vmem:[%s267 + $0x1c] sm:$0xf] %vm689, %v664
      %698 = vst.msk [vmem:[%s267 + $0x20] sm:$0xf] %vm689, %v665
      %699 = vst.msk [vmem:[%s267 + $0x24] sm:$0xf] %vm689, %v666
      %700 = vst.msk [vmem:[%s267 + $0x28] sm:$0xf] %vm689, %v667
      %701 = vst.msk [vmem:[%s267 + $0x2c] sm:$0xf] %vm689, %v668
      %702 = vst.msk [vmem:[%s267 + $0x30] sm:$0xf] %vm689, %v669
      %703 = vst.msk [vmem:[%s267 + $0x34] sm:$0xf] %vm689, %v670
      %704 = vst.msk [vmem:[%s267 + $0x38] sm:$0xf] %vm689, %v671
      %705 = vst.msk [vmem:[%s267 + $0x3c] sm:$0xf] %vm689, %v672
      %s706 = smul.u32 16, %s19
      %p707 = scmp.lt.s32.totalorder %s706, 255
      %s708 = scalar_select %p707, %s706, 255
      %p709 = scmp.lt.s32.totalorder %s20, 0
      %s710 = scalar_select %p709, %s20, 0
      %s711 = sadd.s32 %s710, %s708
      %s712 = smul.addr %s711, 4
      %s713 = scalar_lea.vmem %s4, %s712
      // Predicated region
      $region37: #{tpu_custom_call.1} parent=35 // pred_check
        %p714 = pneg %p151
      $region38: #{tpu_custom_call.1} parent=35 // pred_check_branch
        %716 = sbr.rel (%p714) target = $region40
      $region39: #{tpu_custom_call.1} parent=35 // pred_region
        %s717 = smul.u32 16, %s19
      $region40: #{tpu_custom_call.1} parent=35 // pred_fallthru
        _
    $region36: #{tpu_custom_call.1} parent=5 // pred_fallthru
      _
    %p718 = scmp.le.s32.totalorder 2, %s10
    // Predicated region
    $region41: #{tpu_custom_call.1} parent=5 // pred_check
      %p719 = pneg %p718
    $region42: #{tpu_custom_call.1} parent=5 // pred_check_branch
      %721 = sbr.rel (%p719) target = $region44
    $region43: #{tpu_custom_call.1} parent=5 // pred_region
      %s722 = ssub.s32 %s10, 2
      // Predicated region
      $region45: #{tpu_custom_call.1} parent=43 // pred_check
        %p723 = pneg %p157
      $region46: #{tpu_custom_call.1} parent=43 // pred_check_branch
        %725 = sbr.rel (%p723) target = $region48
      $region47: #{tpu_custom_call.1} parent=43 // pred_region
        %s726 = smul.u32 16, %s21
        %p727 = scmp.lt.s32.totalorder %s726, 255
        %s728 = scalar_select %p727, %s726, 255
        %p729 = scmp.lt.s32.totalorder %s22, 0
        %s730 = scalar_select %p729, %s22, 0
        %s731 = sadd.s32 %s730, %s728
        %s732 = smul.addr %s731, 4
        %s733 = scalar_lea.vmem %s4, %s732
      $region48: #{tpu_custom_call.1} parent=43 // pred_fallthru
        _
    $region44: #{tpu_custom_call.1} parent=5 // pred_fallthru
      _
  $region6: #{tpu_custom_call.1} parent=0 // loop_footer
    %s14 = sadd.s32 1, %s10
  $region7: #{tpu_custom_call.1} parent=0 // loop_footer_branch
    %9 = sbr.rel target = $region3
  $region8: #{tpu_custom_call.1} parent=0 // loop_exit
    _

</llo_original>
